<compile_context>
chip_gen: v7x
topology: tpu7x:2x2x1
jax: 0.10.0
libtpu: 0.0.40
codegen_flags: <defaults>
</compile_context>

<pallas_src>
import functools

import jax
import jax.numpy as jnp
from jax import lax
from jax.experimental import pallas as pl
from jax.experimental.pallas import tpu as pltpu


def _round_up(x, m):
    return ((x + m - 1) // m) * m


def _embed_fc_kernel(x_ref, w1_ref, b1_ref, w2_ref, b2_ref, o_ref, *, approximate):
    # First Linear: (tn, D) @ (D, E) + (1, E), f32 accumulation on the MXU.
    h = jnp.dot(x_ref[...], w1_ref[...], preferred_element_type=jnp.float32)
    h = h + b1_ref[...]
    if approximate:
        # tanh-approx GELU: transcendental runs on the (otherwise idle) EUP slot.
        h = jax.nn.gelu(h, approximate=True)
    else:
        # Exact erf GELU (matches torch.nn.GELU default).
        h = 0.5 * h * (1.0 + lax.erf(h * jnp.float32(0.7071067811865476)))
    # Second Linear: (tn, E) @ (E, Ep) + (1, Ep); Ep lane-padded -> dense stores.
    out = jnp.dot(h, w2_ref[...], preferred_element_type=jnp.float32)
    out = out + b2_ref[...]
    o_ref[...] = out.astype(o_ref.dtype)


def _vmem_bytes(tn, d, e, e_p):
    f32 = 4
    x_buf = 2 * tn * d * f32                       # double-buffered x tile
    out_buf = 2 * tn * e_p * f32                   # double-buffered out tile
    w_buf = 2 * (d * e + e + e * e_p + e_p) * f32  # resident weights/biases (dbl-buffered)
    interm = 2 * tn * max(e, e_p) * f32            # h + accumulator live values
    return x_buf + out_buf + w_buf + interm


def embed_fc(x, w1, b1, w2, b2, *, tile_n=1024, approximate_gelu=False,
             compute_dtype=None):
    """x: any shape whose elements flatten to (-1, input_dim).

    w1: (input_dim, emb_dim), b1: (1, emb_dim) or (emb_dim,)
    w2: (emb_dim, emb_dim),   b2: (1, emb_dim) or (emb_dim,)
    Equivalent to PyTorch x.view(-1, input_dim) -> Linear -> GELU -> Linear
    with weights stored pre-transposed as (in, out).
    """
    input_dim, emb_dim = w1.shape
    x2d = x.reshape(-1, input_dim)
    n = x2d.shape[0]
    out_dtype = x2d.dtype

    if compute_dtype is not None:
        x2d = x2d.astype(compute_dtype)
        w1 = w1.astype(compute_dtype)
        w2 = w2.astype(compute_dtype)

    b1 = b1.reshape(1, emb_dim)
    b2 = b2.reshape(1, emb_dim)

    # Lane-pad only the final output feature dim (dense vst, full-width MXU N).
    e_p = _round_up(emb_dim, 128)
    # Rows: pad to a sublane multiple only; the last grid tile may be ragged.
    n_p = _round_up(max(n, 1), 8)

    # Guarded pads: no extra copies when already aligned.
    x_p = x2d if n_p == n else jnp.pad(x2d, ((0, n_p - n), (0, 0)))
    if e_p == emb_dim:
        w2_p, b2_p = w2, b2
    else:
        w2_p = jnp.pad(w2, ((0, 0), (0, e_p - emb_dim)))
        b2_p = jnp.pad(b2, ((0, 0), (0, e_p - emb_dim)))

    # Row tile selection.
    tn = _round_up(min(tile_n, n_p), 8)
    # v7x has 2 TensorCores: keep >= 2 grid steps when there is work to split.
    if n_p >= 16 and pl.cdiv(n_p, tn) < 2:
        tn = _round_up(pl.cdiv(n_p, 2), 8)
    # Keep the per-TC VMEM footprint well under v7x's 64 MiB.
    vmem_budget = 44 * 1024 * 1024
    while tn > 8 and _vmem_bytes(tn, input_dim, emb_dim, e_p) > vmem_budget:
        tn = _round_up(tn // 2, 8)

    grid = (pl.cdiv(n_p, tn),)

    vmem_est = _vmem_bytes(tn, input_dim, emb_dim, e_p)
    cp_kwargs = dict(dimension_semantics=("parallel",))
    if vmem_est > 24 * 1024 * 1024:
        cp_kwargs["vmem_limit_bytes"] = int(min(56 * 1024 * 1024, vmem_est * 1.5))

    flops = 2 * n_p * input_dim * emb_dim + 2 * n_p * emb_dim * e_p
    bytes_accessed = 4 * (x_p.size + w1.size + b1.size + w2_p.size + b2_p.size
                          + n_p * e_p)
    cost = pl.CostEstimate(flops=flops,
                           transcendentals=n_p * emb_dim,
                           bytes_accessed=bytes_accessed)

    out = pl.pallas_call(
        functools.partial(_embed_fc_kernel, approximate=approximate_gelu),
        out_shape=jax.ShapeDtypeStruct((n_p, e_p), out_dtype),
        grid_spec=pltpu.PrefetchScalarGridSpec(
            num_scalar_prefetch=0,
            grid=grid,
            in_specs=[
                pl.BlockSpec((tn, input_dim), lambda i: (i, 0)),   # x tile (pipelined)
                pl.BlockSpec((input_dim, emb_dim), lambda i: (0, 0)),  # W1 resident
                pl.BlockSpec((1, emb_dim), lambda i: (0, 0)),          # b1 resident
                pl.BlockSpec((emb_dim, e_p), lambda i: (0, 0)),        # W2 resident
                pl.BlockSpec((1, e_p), lambda i: (0, 0)),              # b2 resident
            ],
            out_specs=pl.BlockSpec((tn, e_p), lambda i: (i, 0)),
        ),
        compiler_params=pltpu.CompilerParams(**cp_kwargs),
        cost_estimate=cost,
    )(x_p, w1, b1, w2_p, b2_p)

    if n_p != n or e_p != emb_dim:
        out = out[:n, :emb_dim]
    return out


def init_params(key, input_dim, emb_dim, dtype=jnp.float32):
    """Deterministic synthetic init (PyTorch-like uniform ranges)."""
    k1, k2, k3, k4 = jax.random.split(key, 4)
    bound1 = 1.0 / jnp.sqrt(input_dim)
    bound2 = 1.0 / jnp.sqrt(emb_dim)
    w1 = jax.random.uniform(k1, (input_dim, emb_dim), dtype, -bound1, bound1)
    b1 = jax.random.uniform(k2, (1, emb_dim), dtype, -bound1, bound1)
    w2 = jax.random.uniform(k3, (emb_dim, emb_dim), dtype, -bound2, bound2)
    b2 = jax.random.uniform(k4, (1, emb_dim), dtype, -bound2, bound2)
    return w1, b1, w2, b2


def embed_fc_ref(x, w1, b1, w2, b2):
    """Pure-JAX reference for correctness check."""
    input_dim = w1.shape[0]
    x2d = x.reshape(-1, input_dim)
    h = x2d @ w1 + b1.reshape(1, -1)
    h = 0.5 * h * (1.0 + lax.erf(h / jnp.sqrt(2.0)))
    return h @ w2 + b2.reshape(1, -1)


if __name__ == "__main__":
    # Matches Dif-GSR unet usage: EmbedFC(input_dim, emb_dim) on a conditioning
    # tensor flattened to (-1, input_dim).
    input_dim = 32
    emb_dim = 64
    batch = 8

    key = jax.random.PRNGKey(0)
    kx, kp = jax.random.split(key)
    x = jax.random.normal(kx, (batch, input_dim), dtype=jnp.float32)
    w1, b1, w2, b2 = init_params(kp, input_dim, emb_dim)

    out = embed_fc(x, w1, b1, w2, b2)
    out = jax.block_until_ready(out)

    ref = embed_fc_ref(x, w1, b1, w2, b2)
    assert out.shape == (batch, emb_dim)
    assert jnp.allclose(out, ref, atol=1e-5, rtol=1e-5)

    # Row count that is NOT a multiple of 8 (ragged last tile + small row pad).
    x_odd = jax.random.normal(kx, (13, input_dim), dtype=jnp.float32)
    out_odd = jax.block_until_ready(embed_fc(x_odd, w1, b1, w2, b2))
    assert jnp.allclose(out_odd, embed_fc_ref(x_odd, w1, b1, w2, b2),
                        atol=1e-5, rtol=1e-5)

    # Fully aligned case (no padding copies, no output slice), multi-tile grid.
    w1b, b1b, w2b, b2b = init_params(kp, 128, 128)
    x_big = jax.random.normal(kx, (272, 128), dtype=jnp.float32)
    out_big = jax.block_until_ready(embed_fc(x_big, w1b, b1b, w2b, b2b, tile_n=128))
    assert jnp.allclose(out_big, embed_fc_ref(x_big, w1b, b1b, w2b, b2b),
                        atol=1e-4, rtol=1e-4)

    print("KERNEL_OK")
</pallas_src>

<mosaic_0001>
module attributes {stable_mosaic.version = 11 : i64} {
  func.func @_embed_fc_kernel(%arg0: i32, %arg1: memref<8x32xf32, #tpu.memory_space<vmem>>, %arg2: memref<32x64xf32, #tpu.memory_space<vmem>>, %arg3: memref<1x64xf32, #tpu.memory_space<vmem>>, %arg4: memref<64x128xf32, #tpu.memory_space<vmem>>, %arg5: memref<1x128xf32, #tpu.memory_space<vmem>>, %arg6: memref<8x128xf32, #tpu.memory_space<vmem>>) attributes {dimension_semantics = [#tpu.dimension_semantics<parallel>], iteration_bounds = array<i64: 1>, scalar_prefetch = 0 : i64, scratch_operands = 0 : i64, tpu.core_type = #tpu.core_type<tc>, window_params = [{transform_indices = @transform_0, window_bounds = array<i64: 8, 32>}, {pipeline_mode = #tpu.pipeline_mode<synchronous>, transform_indices = @transform_1, window_bounds = array<i64: 32, 64>}, {pipeline_mode = #tpu.pipeline_mode<synchronous>, transform_indices = @transform_2, window_bounds = array<i64: 1, 64>}, {pipeline_mode = #tpu.pipeline_mode<synchronous>, transform_indices = @transform_3, window_bounds = array<i64: 64, 128>}, {pipeline_mode = #tpu.pipeline_mode<synchronous>, transform_indices = @transform_4, window_bounds = array<i64: 1, 128>}, {transform_indices = @transform_5, window_bounds = array<i64: 8, 128>}]} {
    %c0 = arith.constant 0 : index
    %c0_0 = arith.constant 0 : index
    %0 = vector.load %arg1[%c0, %c0_0] : memref<8x32xf32, #tpu.memory_space<vmem>>, vector<8x32xf32>
    %c0_1 = arith.constant 0 : index
    %c0_2 = arith.constant 0 : index
    %1 = vector.load %arg2[%c0_1, %c0_2] : memref<32x64xf32, #tpu.memory_space<vmem>>, vector<32x64xf32>
    %cst = arith.constant dense<0.000000e+00> : vector<8x64xf32>
    %2 = tpu.matmul %0, %1, %cst {dimension_numbers = #tpu.dot_dimension_numbers<[1], [0], [0], [1], [0, 0, 1, 1], [], []>} : vector<8x32xf32>, vector<32x64xf32>, vector<8x64xf32> -> vector<8x64xf32>
    %c0_3 = arith.constant 0 : index
    %c0_4 = arith.constant 0 : index
    %3 = vector.load %arg3[%c0_3, %c0_4] : memref<1x64xf32, #tpu.memory_space<vmem>>, vector<1x64xf32>
    %4 = vector.broadcast %3 : vector<1x64xf32> to vector<8x64xf32>
    %5 = arith.addf %2, %4 : vector<8x64xf32>
    %cst_5 = arith.constant 5.000000e-01 : f32
    %6 = vector.broadcast %cst_5 : f32 to vector<8x64xf32>
    %7 = arith.mulf %6, %5 : vector<8x64xf32>
    %cst_6 = arith.constant 0.707106769 : f32
    %8 = vector.broadcast %cst_6 : f32 to vector<8x64xf32>
    %9 = arith.mulf %5, %8 : vector<8x64xf32>
    %10 = math.erf %9 : vector<8x64xf32>
    %cst_7 = arith.constant 1.000000e+00 : f32
    %11 = vector.broadcast %cst_7 : f32 to vector<8x64xf32>
    %12 = arith.addf %11, %10 : vector<8x64xf32>
    %13 = arith.mulf %7, %12 : vector<8x64xf32>
    %c0_8 = arith.constant 0 : index
    %c0_9 = arith.constant 0 : index
    %14 = vector.load %arg4[%c0_8, %c0_9] : memref<64x128xf32, #tpu.memory_space<vmem>>, vector<64x128xf32>
    %cst_10 = arith.constant dense<0.000000e+00> : vector<8x128xf32>
    %15 = tpu.matmul %13, %14, %cst_10 {dimension_numbers = #tpu.dot_dimension_numbers<[1], [0], [0], [1], [0, 0, 1, 1], [], []>} : vector<8x64xf32>, vector<64x128xf32>, vector<8x128xf32> -> vector<8x128xf32>
    %c0_11 = arith.constant 0 : index
    %c0_12 = arith.constant 0 : index
    %16 = vector.load %arg5[%c0_11, %c0_12] : memref<1x128xf32, #tpu.memory_space<vmem>>, vector<1x128xf32>
    %17 = vector.broadcast %16 : vector<1x128xf32> to vector<8x128xf32>
    %18 = arith.addf %15, %17 : vector<8x128xf32>
    %c0_13 = arith.constant 0 : index
    %c0_14 = arith.constant 0 : index
    %19 = vector.load %arg6[%c0_13, %c0_14] : memref<8x128xf32, #tpu.memory_space<vmem>>, vector<8x128xf32>
    tpu.vector_store %arg6[%c0_13, %c0_14], %18 {strides = array<i32>} : memref<8x128xf32, #tpu.memory_space<vmem>>, vector<8x128xf32>,
    return
  }
  func.func @transform_0(%arg0: i32) -> (i32, i32) {
    %c0_i32 = arith.constant 0 : i32
    %c0_i32_0 = arith.constant 0 : i32
    return %arg0, %c0_i32 : i32, i32
  }
  func.func @transform_1(%arg0: i32) -> (i32, i32) {
    %c0_i32 = arith.constant 0 : i32
    %c0_i32_0 = arith.constant 0 : i32
    %c0_i32_1 = arith.constant 0 : i32
    return %c0_i32, %c0_i32_0 : i32, i32
  }
  func.func @transform_2(%arg0: i32) -> (i32, i32) {
    %c0_i32 = arith.constant 0 : i32
    %c0_i32_0 = arith.constant 0 : i32
    %c0_i32_1 = arith.constant 0 : i32
    return %c0_i32, %c0_i32_0 : i32, i32
  }
  func.func @transform_3(%arg0: i32) -> (i32, i32) {
    %c0_i32 = arith.constant 0 : i32
    %c0_i32_0 = arith.constant 0 : i32
    %c0_i32_1 = arith.constant 0 : i32
    return %c0_i32, %c0_i32_0 : i32, i32
  }
  func.func @transform_4(%arg0: i32) -> (i32, i32) {
    %c0_i32 = arith.constant 0 : i32
    %c0_i32_0 = arith.constant 0 : i32
    %c0_i32_1 = arith.constant 0 : i32
    return %c0_i32, %c0_i32_0 : i32, i32
  }
  func.func @transform_5(%arg0: i32) -> (i32, i32) {
    %c0_i32 = arith.constant 0 : i32
    %c0_i32_0 = arith.constant 0 : i32
    return %arg0, %c0_i32 : i32, i32
  }
}

</mosaic_0001>

<llo_original>
// kernel: tpu_custom_call.1
$region0: #{tpu_custom_call.1}
  #allocation0 [shape = 'u32[]', space=smem, size = 0x4, offset = 0x4, fixed_abs, tag = 'smem constant byte address 0x4 - core index']
  #allocation1 [shape = 'u32[144,128]{1,0:T(1,128)}', space=vmem, size = 0x12000, scoped, tag = 'internal scratch']
  %s0 = inlined_call_operand.hbm [shape: f32[8,32], index: 0, kind: input, shape index: {}]
  %s1 = inlined_call_operand.hbm [shape: f32[32,64], index: 1, kind: input, shape index: {}]
  %s2 = inlined_call_operand.vmem [shape: f32[1,64], index: 2, kind: input, shape index: {}]
  %s3 = inlined_call_operand.hbm [shape: f32[64,128], index: 3, kind: input, shape index: {}]
  %s4 = inlined_call_operand.vmem [shape: f32[1,128], index: 4, kind: input, shape index: {}]
  %s5 = inlined_call_operand.hbm [shape: f32[8,128], index: 5, kind: output, shape index: {}]
  %s6 = sld [smem:[#allocation0]]
  $region42: #{tpu_custom_call.1} parent=0
    _
  %s8 = ssub.s32 1, %s6
  %s9 = scalar_select 0, %s8, %s6
  $region1: #{tpu_custom_call.1} parent=0
    #allocation2 [shape = 'u8[4096]{0}', space=vmem, size = 0x1000, scoped, tag = 'input window, operand 0, single buffered']
    #allocation3 [shape = 's32[1]{0}', space=sflag, size = 0x4, scoped, tag = 'scoped memory for tpu_custom_call.1']
    #allocation4 [shape = 's32[1]{0}', space=sflag, size = 0x4, scoped, tag = 'scoped memory for tpu_custom_call.1']
    #allocation5 [shape = 'u8[16384]{0}', space=vmem, size = 0x4000, scoped, tag = 'input window, operand 1, single buffered']
    #allocation6 [shape = 's32[1]{0}', space=sflag, size = 0x4, scoped, tag = 'scoped memory for tpu_custom_call.1']
    #allocation7 [shape = 'u8[32768]{0}', space=vmem, size = 0x8000, scoped, tag = 'input window, operand 3, single buffered']
    #allocation8 [shape = 'u8[4096]{0}', space=vmem, size = 0x1000, scoped, tag = 'output window, operand 0, single buffered']
    %10 = vsyncpa [#allocation3], 0
    %11 = vsyncpa [#allocation6], 0
    %12 = vsyncpa [#allocation4], 0
    // Predicated region
    $region2: #{tpu_custom_call.1} parent=1 // pred_check
      _
    $region3: #{tpu_custom_call.1} parent=1 // pred_check_branch
      %14 = sbr.rel (0) target = $region5
    $region4: #{tpu_custom_call.1} parent=1 // pred_region
      %s16 = ssub.s32 128, 128
      %17 = vsyncadd [#allocation3], %s16
      %s19 = sshll.u32 [#allocation2], 4
      %s20 = int_to_ptr.vmem [resolvable:$true] %s19
      %22 = dma.hbm_to_vmem [thread:$0]  %s0, 128, %s20, [#allocation3]
    $region5: #{tpu_custom_call.1} parent=1 // pred_fallthru
      _
    // Predicated region
    $region6: #{tpu_custom_call.1} parent=1 // pred_check
      _
    $region7: #{tpu_custom_call.1} parent=1 // pred_check_branch
      %24 = sbr.rel (0) target = $region9
    $region8: #{tpu_custom_call.1} parent=1 // pred_region
      %s26 = ssub.s32 512, 512
      %27 = vsyncadd [#allocation6], %s26
      %s28 = sshll.u32 [#allocation5], 4
      %s29 = int_to_ptr.vmem [resolvable:$true] %s28
      %34 = dma.hbm_to_vmem [thread:$0]  %s1, 512, %s29, [#allocation6], 128, 128, 8
    $region9: #{tpu_custom_call.1} parent=1 // pred_fallthru
      _
    // Predicated region
    $region10: #{tpu_custom_call.1} parent=1 // pred_check
      _
    $region11: #{tpu_custom_call.1} parent=1 // pred_check_branch
      %36 = sbr.rel (0) target = $region13
    $region12: #{tpu_custom_call.1} parent=1 // pred_region
      _
    $region13: #{tpu_custom_call.1} parent=1 // pred_fallthru
      _
    // Predicated region
    $region14: #{tpu_custom_call.1} parent=1 // pred_check
      _
    $region15: #{tpu_custom_call.1} parent=1 // pred_check_branch
      %38 = sbr.rel (0) target = $region17
    $region16: #{tpu_custom_call.1} parent=1 // pred_region
      %s40 = ssub.s32 1024, 1024
      %41 = vsyncadd [#allocation6], %s40
      %s42 = sshll.u32 [#allocation7], 4
      %s43 = int_to_ptr.vmem [resolvable:$true] %s42
      %48 = dma.hbm_to_vmem [thread:$0]  %s3, 1024, %s43, [#allocation6], 128, 128, 8
    $region17: #{tpu_custom_call.1} parent=1 // pred_fallthru
      _
    // Predicated region
    $region18: #{tpu_custom_call.1} parent=1 // pred_check
      _
    $region19: #{tpu_custom_call.1} parent=1 // pred_check_branch
      %50 = sbr.rel (0) target = $region21
    $region20: #{tpu_custom_call.1} parent=1 // pred_region
      _
    $region21: #{tpu_custom_call.1} parent=1 // pred_fallthru
      _
    // Predicated region
    $region22: #{tpu_custom_call.1} parent=1 // pred_check
      _
    $region23: #{tpu_custom_call.1} parent=1 // pred_check_branch
      %52 = sbr.rel (0) target = $region25
    $region24: #{tpu_custom_call.1} parent=1 // pred_region
      %53 = dma.done [#allocation3], 128
    $region25: #{tpu_custom_call.1} parent=1 // pred_fallthru
      _
    // Predicated region
    $region26: #{tpu_custom_call.1} parent=1 // pred_check
      _
    $region27: #{tpu_custom_call.1} parent=1 // pred_check_branch
      %55 = sbr.rel (0) target = $region29
    $region28: #{tpu_custom_call.1} parent=1 // pred_region
      %56 = dma.done [#allocation6], 512
    $region29: #{tpu_custom_call.1} parent=1 // pred_fallthru
      _
    // Predicated region
    $region30: #{tpu_custom_call.1} parent=1 // pred_check
      _
    $region31: #{tpu_custom_call.1} parent=1 // pred_check_branch
      %58 = sbr.rel (0) target = $region33
    $region32: #{tpu_custom_call.1} parent=1 // pred_region
      %59 = dma.done [#allocation6], 1024
    $region33: #{tpu_custom_call.1} parent=1 // pred_fallthru
      _
    %v60 = vld [vmem:[#allocation2] sm:$0xff]
    %v61 = vld [vmem:[#allocation5] sm:$0xff]
    %v62 = vld [vmem:[#allocation5 + $0x8] sm:$0xff]
    %v63 = vld [vmem:[#allocation5 + $0x10] sm:$0xff]
    %v64 = vld [vmem:[#allocation5 + $0x18] sm:$0xff]
    %v65 = vld [vmem:[%s2] sm:$0x1]
    %v67 = vlaneseq
    %v68 = vshrl.u32 %v67, 7
    %v69 = vsub.s32 0, %v68
    %v70 = vrot.slane %v65, %v69
    %vm72 = vcmask 261120
    %v74 = vsel %vm72, %v60, 0
    %76 = vmatprep.subr.mxu0 0.0
    %77 = vmatpush1.msra.mxu0 %v61
    %78 = vmatprep.subr.mxu0 0.0
    %79 = vmatpush1.msra.mxu0 %v62
    %80 = vmatprep.subr.mxu0 0.0
    %81 = vmatpush1.msra.mxu0 %v63
    %82 = vmatprep.subr.mxu0 0.0
    %83 = vmatpush1.msra.mxu0 %v64
    %84 = vmatprep.subr.mxu0 0.0
    %85 = vmatpush1.msra.mxu0 0.0
    %86 = vmatprep.subr.mxu0 0.0
    %87 = vmatpush1.msra.mxu0 0.0
    %88 = vmatprep.subr.mxu0 0.0
    %89 = vmatpush1.msra.mxu0 0.0
    %90 = vmatprep.subr.mxu0 0.0
    %91 = vmatpush1.msra.mxu0 0.0
    %92 = vmatprep.subr.mxu0 0.0
    %93 = vmatpush1.msra.mxu0 0.0
    %94 = vmatprep.subr.mxu0 0.0
    %95 = vmatpush1.msra.mxu0 0.0
    %96 = vmatprep.subr.mxu0 0.0
    %97 = vmatpush1.msra.mxu0 0.0
    %98 = vmatprep.subr.mxu0 0.0
    %99 = vmatpush1.msra.mxu0 0.0
    %100 = vmatprep.subr.mxu0 0.0
    %101 = vmatpush1.msra.mxu0 0.0
    %102 = vmatprep.subr.mxu0 0.0
    %103 = vmatpush1.msra.mxu0 0.0
    %104 = vmatprep.subr.mxu0 0.0
    %105 = vmatpush1.msra.mxu0 0.0
    %106 = vmatprep.subr.mxu0 0.0
    %107 = vmatpush1.msra.mxu0 0.0
    %108 = vmatprep.subr.mxu0 0.0
    %109 = vmatpush1.msra.mxu0 0.0
    %110 = vmatprep.subr.mxu0 0.0
    %111 = vmatpush1.msra.mxu0 0.0
    %112 = vmatprep.subr.mxu0 0.0
    %113 = vmatpush1.msra.mxu0 0.0
    %114 = vmatprep.subr.mxu0 0.0
    %115 = vmatpush1.msra.mxu0 0.0
    %116 = vmatprep.subr.mxu0 0.0
    %117 = vmatpush1.msra.mxu0 0.0
    %118 = vmatprep.subr.mxu0 0.0
    %119 = vmatpush1.msra.mxu0 0.0
    %120 = vmatprep.subr.mxu0 0.0
    %121 = vmatpush1.msra.mxu0 0.0
    %122 = vmatprep.subr.mxu0 0.0
    %123 = vmatpush1.msra.mxu0 0.0
    %124 = vmatprep.subr.mxu0 0.0
    %125 = vmatpush1.msra.mxu0 0.0
    %126 = vmatprep.subr.mxu0 0.0
    %127 = vmatpush1.msra.mxu0 0.0
    %128 = vmatprep.subr.mxu0 0.0
    %129 = vmatpush1.msra.mxu0 0.0
    %130 = vmatprep.subr.mxu0 0.0
    %131 = vmatpush1.msra.mxu0 0.0
    %132 = vmatprep.subr.mxu0 0.0
    %133 = vmatpush1.msra.mxu0 0.0
    %134 = vmatprep.subr.mxu0 0.0
    %135 = vmatpush1.msra.mxu0 0.0
    %136 = vmatprep.subr.mxu0 0.0
    %137 = vmatpush1.msra.mxu0 0.0
    %138 = vmatprep.subr.mxu0 0.0
    %139 = vmatpush1.msra.mxu0 0.0
    %140 = vmatprep.mubr.f32.mxu0 0.0
    %141 = vmatmul.mubr.f32.gmra.mrb[0].mxu0 %v74
    %v142 = vpop.f32.mrb[0].mxu0
    %v143 = vadd.f32 %v70, %v142
    %v144 = vpop.f32.mrb[0].mxu0
    %145 = vdwg.mxu0
    %v146 = vmul.f32 %v143, 0.5
    %v147 = vmul.f32 %v143, 0.70710677
    %v148 = verf.f32.pop %v147
    %v149 = vadd.f32 %v148, 1.0
    %v150 = vmul.f32 %v146, %v149
    %v151 = vld [vmem:[#allocation7] sm:$0xff]
    %v152 = vld [vmem:[#allocation7 + $0x8] sm:$0xff]
    %v153 = vld [vmem:[#allocation7 + $0x10] sm:$0xff]
    %v154 = vld [vmem:[#allocation7 + $0x18] sm:$0xff]
    %v155 = vld [vmem:[#allocation7 + $0x20] sm:$0xff]
    %v156 = vld [vmem:[#allocation7 + $0x28] sm:$0xff]
    %v157 = vld [vmem:[#allocation7 + $0x30] sm:$0xff]
    %v158 = vld [vmem:[#allocation7 + $0x38] sm:$0xff]
    %v159 = vld [vmem:[%s4] sm:$0x1]
    %v161 = vlaneseq
    %v162 = vshrl.u32 %v161, 7
    %v163 = vsub.s32 0, %v162
    %v164 = vrot.slane %v159, %v163
    %vm166 = vcmask 523264
    %v168 = vsel %vm166, %v150, 0
    %170 = vmatprep.subr.mxu0 0.0
    %171 = vmatpush1.msra.mxu0 %v151
    %172 = vmatprep.subr.mxu0 0.0
    %173 = vmatpush1.msra.mxu0 %v152
    %174 = vmatprep.subr.mxu0 0.0
    %175 = vmatpush1.msra.mxu0 %v153
    %176 = vmatprep.subr.mxu0 0.0
    %177 = vmatpush1.msra.mxu0 %v154
    %178 = vmatprep.subr.mxu0 0.0
    %179 = vmatpush1.msra.mxu0 %v155
    %180 = vmatprep.subr.mxu0 0.0
    %181 = vmatpush1.msra.mxu0 %v156
    %182 = vmatprep.subr.mxu0 0.0
    %183 = vmatpush1.msra.mxu0 %v157
    %184 = vmatprep.subr.mxu0 0.0
    %185 = vmatpush1.msra.mxu0 %v158
    %186 = vmatprep.subr.mxu0 0.0
    %187 = vmatpush1.msra.mxu0 0.0
    %188 = vmatprep.subr.mxu0 0.0
    %189 = vmatpush1.msra.mxu0 0.0
    %190 = vmatprep.subr.mxu0 0.0
    %191 = vmatpush1.msra.mxu0 0.0
    %192 = vmatprep.subr.mxu0 0.0
    %193 = vmatpush1.msra.mxu0 0.0
    %194 = vmatprep.subr.mxu0 0.0
    %195 = vmatpush1.msra.mxu0 0.0
    %196 = vmatprep.subr.mxu0 0.0
    %197 = vmatpush1.msra.mxu0 0.0
    %198 = vmatprep.subr.mxu0 0.0
    %199 = vmatpush1.msra.mxu0 0.0
    %200 = vmatprep.subr.mxu0 0.0
    %201 = vmatpush1.msra.mxu0 0.0
    %202 = vmatprep.subr.mxu0 0.0
    %203 = vmatpush1.msra.mxu0 0.0
    %204 = vmatprep.subr.mxu0 0.0
    %205 = vmatpush1.msra.mxu0 0.0
    %206 = vmatprep.subr.mxu0 0.0
    %207 = vmatpush1.msra.mxu0 0.0
    %208 = vmatprep.subr.mxu0 0.0
    %209 = vmatpush1.msra.mxu0 0.0
    %210 = vmatprep.subr.mxu0 0.0
    %211 = vmatpush1.msra.mxu0 0.0
    %212 = vmatprep.subr.mxu0 0.0
    %213 = vmatpush1.msra.mxu0 0.0
    %214 = vmatprep.subr.mxu0 0.0
    %215 = vmatpush1.msra.mxu0 0.0
    %216 = vmatprep.subr.mxu0 0.0
    %217 = vmatpush1.msra.mxu0 0.0
    %218 = vmatprep.subr.mxu0 0.0
    %219 = vmatpush1.msra.mxu0 0.0
    %220 = vmatprep.subr.mxu0 0.0
    %221 = vmatpush1.msra.mxu0 0.0
    %222 = vmatprep.subr.mxu0 0.0
    %223 = vmatpush1.msra.mxu0 0.0
    %224 = vmatprep.subr.mxu0 0.0
    %225 = vmatpush1.msra.mxu0 0.0
    %226 = vmatprep.subr.mxu0 0.0
    %227 = vmatpush1.msra.mxu0 0.0
    %228 = vmatprep.subr.mxu0 0.0
    %229 = vmatpush1.msra.mxu0 0.0
    %230 = vmatprep.subr.mxu0 0.0
    %231 = vmatpush1.msra.mxu0 0.0
    %232 = vmatprep.subr.mxu0 0.0
    %233 = vmatpush1.msra.mxu0 0.0
    %234 = vmatprep.mubr.f32.mxu0 0.0
    %235 = vmatmul.mubr.f32.gmra.mrb[0].mxu0 %v168
    %v236 = vpop.f32.mrb[0].mxu0
    %v237 = vadd.f32 %v164, %v236
    %v238 = vpop.f32.mrb[0].mxu0
    %239 = vdwg.mxu0
    %240 = vst [vmem:[#allocation8] sm:$0xff] %v237
    // Predicated region
    $region34: #{tpu_custom_call.1} parent=1 // pred_check
      _
    $region35: #{tpu_custom_call.1} parent=1 // pred_check_branch
      %242 = sbr.rel (0) target = $region37
    $region36: #{tpu_custom_call.1} parent=1 // pred_region
      %s244 = ssub.s32 128, 128
      %245 = vsyncadd [#allocation4], %s244
      %s247 = sshll.u32 [#allocation8], 4
      %s248 = int_to_ptr.vmem [resolvable:$true] %s247
      %250 = dma.vmem_to_hbm [thread:$0]  %s248, 128, %s5, [#allocation4]
    $region37: #{tpu_custom_call.1} parent=1 // pred_fallthru
      _
    // Predicated region
    $region38: #{tpu_custom_call.1} parent=1 // pred_check
      _
    $region39: #{tpu_custom_call.1} parent=1 // pred_check_branch
      %252 = sbr.rel (0) target = $region41
    $region40: #{tpu_custom_call.1} parent=1 // pred_region
      %253 = dma.done [#allocation4], 128
    $region41: #{tpu_custom_call.1} parent=1 // pred_fallthru
      _
    %254 = vsyncpa [#allocation3], 1
    %255 = vsyncpa [#allocation6], 1
    %256 = vsyncpa [#allocation4], 1

</llo_original>
